<compile_context>
chip_gen: v7x
topology: tpu7x:2x2x1
jax: 0.10.0
libtpu: 0.0.40
codegen_flags: <defaults>
</compile_context>

<pallas_src>
import functools

import jax
import jax.numpy as jnp
from jax import lax
from jax.experimental import pallas as pl
from jax.experimental.pallas import tpu as pltpu


_LINEAR_VMEM_LIMIT = 32 * 1024 * 1024   # plenty for 512x512x1024 bf16 tiles + f32 acc
_ATTN_VMEM_LIMIT = 48 * 1024 * 1024     # below v7x's 64 MiB physical VMEM


def _round_up(x, m):
    return ((x + m - 1) // m) * m


def _pick_tile(dim, target, align):
    """Pick a tile size <= target for `dim`. Returns (tile, padded_dim).

    Preference: full dim (no grid axis) -> a not-too-small divisor of `dim`
    that is a multiple of `align` (no padding) -> balanced blocks with minimal
    zero padding."""
    if dim <= target:
        return dim, dim
    t = (target // align) * align
    while t >= max(align, target // 2):
        if dim % t == 0:
            return t, dim
        t -= align
    nblk = -(-dim // target)
    t = _round_up(-(-dim // nblk), align)
    return t, t * nblk


# ----------------------------------------------------------------------------
# Tiled linear (matmul [+ bias]) kernels
# ----------------------------------------------------------------------------
def _linear_kernel(x_ref, w_ref, o_ref, acc_ref):
    @pl.when(pl.program_id(2) == 0)
    def _():
        acc_ref[...] = jnp.zeros_like(acc_ref)

    acc_ref[...] += jnp.dot(x_ref[...], w_ref[...], preferred_element_type=jnp.float32)

    @pl.when(pl.program_id(2) == pl.num_programs(2) - 1)
    def _():
        o_ref[...] = acc_ref[...].astype(o_ref.dtype)


def _linear_bias_kernel(x_ref, w_ref, b_ref, o_ref, acc_ref):
    @pl.when(pl.program_id(2) == 0)
    def _():
        acc_ref[...] = jnp.zeros_like(acc_ref)

    acc_ref[...] += jnp.dot(x_ref[...], w_ref[...], preferred_element_type=jnp.float32)

    @pl.when(pl.program_id(2) == pl.num_programs(2) - 1)
    def _():
        o_ref[...] = (acc_ref[...] + b_ref[...]).astype(o_ref.dtype)


class PallasLinear:
    """y = x2d @ W (+ b).  Weight is pre-cast to bf16 and pre-padded at init."""

    def __init__(self, w, bias=None, *, tn_target=512, tk_target=1024):
        K, N = w.shape
        self.K, self.N = K, N
        self.tk, self.Kp = _pick_tile(K, tk_target, 128)
        self.tn, self.Np = _pick_tile(N, tn_target, 128)

        wb = w.astype(jnp.bfloat16)
        if (self.Kp, self.Np) != (K, N):
            wb = jnp.pad(wb, ((0, self.Kp - K), (0, self.Np - N)))
        self.w_bf16 = wb

        if bias is not None:
            b2 = bias.astype(jnp.float32).reshape(1, N)
            if self.Np != N:
                b2 = jnp.pad(b2, ((0, 0), (0, self.Np - N)))
            self.bias = b2
        else:
            self.bias = None

    def __call__(self, x2d, *, out_dtype=None, tm_target=512):
        M, K = x2d.shape
        assert K == self.K
        out_dtype = out_dtype if out_dtype is not None else x2d.dtype

        tm, Mp = _pick_tile(M, tm_target, 8)
        xb = x2d.astype(jnp.bfloat16)
        if (Mp, self.Kp) != (M, K):
            xb = jnp.pad(xb, ((0, Mp - M), (0, self.Kp - K)))

        grid = (Mp // tm, self.Np // self.tn, self.Kp // self.tk)
        x_spec = pl.BlockSpec((tm, self.tk), lambda i, j, k: (i, k))
        w_spec = pl.BlockSpec((self.tk, self.tn), lambda i, j, k: (k, j))
        common = dict(
            out_shape=jax.ShapeDtypeStruct((Mp, self.Np), out_dtype),
            grid=grid,
            out_specs=pl.BlockSpec((tm, self.tn), lambda i, j, k: (i, j)),
            scratch_shapes=[pltpu.VMEM((tm, self.tn), jnp.float32)],
            compiler_params=pltpu.CompilerParams(
                dimension_semantics=("parallel", "parallel", "arbitrary"),
                vmem_limit_bytes=_LINEAR_VMEM_LIMIT,
            ),
        )

        if self.bias is not None:
            b_spec = pl.BlockSpec((1, self.tn), lambda i, j, k: (0, j))
            out = pl.pallas_call(
                _linear_bias_kernel, in_specs=[x_spec, w_spec, b_spec], **common
            )(xb, self.w_bf16, self.bias)
        else:
            out = pl.pallas_call(
                _linear_kernel, in_specs=[x_spec, w_spec], **common
            )(xb, self.w_bf16)

        if (Mp, self.Np) != (M, self.N):
            out = out[:M, : self.N]
        return out


# ----------------------------------------------------------------------------
# Fused multi-head attention kernels
# ----------------------------------------------------------------------------
def _attn_heads(q_ref, k_ref, v_ref, o_ref, n_heads, dim_head, q_off, k_off, v_off):
    """softmax(q k^T) v per head; per-head ref slices + per-head stores.

    Softmax scale is already folded into the Q columns of the QKV weight, so no
    rescaling happens here."""
    for hh in range(n_heads):  # static unrolled loop, static lane slices
        lo = hh * dim_head
        q = q_ref[0, :, q_off + lo: q_off + lo + dim_head]   # (N, D) bf16
        k = k_ref[0, :, k_off + lo: k_off + lo + dim_head]
        v = v_ref[0, :, v_off + lo: v_off + lo + dim_head]

        # q @ k^T without materializing a transpose: contract last axes of both.
        dots = lax.dot_general(
            q, k, (((1,), (1,)), ((), ())), preferred_element_type=jnp.float32
        )  # (N, N) f32

        # Numerically-stable softmax (matches torch.nn.Softmax(dim=-1)); division
        # replaced with the EUP approximate reciprocal.
        m = jnp.max(dots, axis=-1, keepdims=True)
        e = jnp.exp(dots - m)
        denom = jnp.sum(e, axis=-1, keepdims=True)
        p = (e * pl.reciprocal(denom, approx=True)).astype(v.dtype)

        out_h = jnp.dot(p, v, preferred_element_type=jnp.float32)  # (N, D) f32
        o_ref[0, :, lo: lo + dim_head] = out_h.astype(o_ref.dtype)


def _attn_group_kernel(q_ref, k_ref, v_ref, o_ref, *, group_heads, dim_head):
    # q_ref/k_ref/v_ref: (1, N, group_heads*dim_head) lane-aligned group blocks.
    _attn_heads(q_ref, k_ref, v_ref, o_ref, group_heads, dim_head, 0, 0, 0)


def _attn_fused_kernel(qkv_ref, o_ref, *, heads, dim_head):
    # qkv_ref: (1, N, 3*H*D) — layout [q(h d) | k(h d) | v(h d)].
    inner = heads * dim_head
    _attn_heads(qkv_ref, qkv_ref, qkv_ref, o_ref, heads, dim_head, 0, inner, 2 * inner)


def _pick_group_heads(heads, dim_head):
    """Smallest head-group size whose lane width is a multiple of 128 (None if
    no such grouping exists)."""
    for g in range(1, heads + 1):
        if heads % g == 0 and (g * dim_head) % 128 == 0:
            return g
    return None


def pallas_attention(qkv, *, heads, dim_head, out_dtype=jnp.bfloat16):
    """qkv: (B, N, 3*H*D) -> out: (B, N, H*D)."""
    B, N, three_inner = qkv.shape
    inner = heads * dim_head
    assert three_inner == 3 * inner

    group_heads = _pick_group_heads(heads, dim_head)

    if group_heads is not None:
        # Lane-aligned group split: grid (B, n_groups), both axes parallel
        # (keeps both v7x TensorCores busy); 128-wide q/k/v/out blocks.
        n_groups = heads // group_heads
        gw = group_heads * dim_head
        kernel = functools.partial(
            _attn_group_kernel, group_heads=group_heads, dim_head=dim_head
        )
        return pl.pallas_call(
            kernel,
            out_shape=jax.ShapeDtypeStruct((B, N, inner), out_dtype),
            grid=(B, n_groups),
            in_specs=[
                pl.BlockSpec((1, N, gw), lambda b, g: (b, 0, g)),                  # q
                pl.BlockSpec((1, N, gw), lambda b, g: (b, 0, n_groups + g)),       # k
                pl.BlockSpec((1, N, gw), lambda b, g: (b, 0, 2 * n_groups + g)),   # v
            ],
            out_specs=pl.BlockSpec((1, N, gw), lambda b, g: (b, 0, g)),
            compiler_params=pltpu.CompilerParams(
                dimension_semantics=("parallel", "parallel"),
                vmem_limit_bytes=_ATTN_VMEM_LIMIT,
            ),
        )(qkv, qkv, qkv)

    # Fallback (odd/small head widths): one full-width qkv block per batch step.
    kernel = functools.partial(_attn_fused_kernel, heads=heads, dim_head=dim_head)
    return pl.pallas_call(
        kernel,
        out_shape=jax.ShapeDtypeStruct((B, N, inner), out_dtype),
        grid=(B,),
        in_specs=[pl.BlockSpec((1, N, 3 * inner), lambda b: (b, 0, 0))],
        out_specs=pl.BlockSpec((1, N, inner), lambda b: (b, 0, 0)),
        compiler_params=pltpu.CompilerParams(
            dimension_semantics=("parallel",),
            vmem_limit_bytes=_ATTN_VMEM_LIMIT,
        ),
    )(qkv)


# ----------------------------------------------------------------------------
# Module wrapper (mirrors the PyTorch Attention module)
# ----------------------------------------------------------------------------
class AttentionPallas:
    def __init__(self, dim, heads=8, dim_head=64, dropout=0.0, *, key):
        inner_dim = dim_head * heads
        self.heads = heads
        self.dim_head = dim_head
        self.scale = dim_head ** (-0.5)
        self.project_out = not (heads == 1 and dim_head == dim)
        # TODO(synk): dropout not implemented (p=0.0 in this config -> identity).

        k1, k2, k3 = jax.random.split(key, 3)
        # torch nn.Linear(dim, inner*3, bias=False): y = x @ W^T; store (dim, 3*inner)
        self.w_qkv_t = (
            jax.random.normal(k1, (dim, inner_dim * 3), dtype=jnp.float32) * 0.02
        )
        if self.project_out:
            # nn.Linear(inner, dim) (bias=True by default): store (inner, dim) + (dim,)
            self.w_out_t = (
                jax.random.normal(k2, (inner_dim, dim), dtype=jnp.float32) * 0.02
            )
            self.b_out = jax.random.normal(k3, (dim,), dtype=jnp.float32) * 0.02
        else:
            self.w_out_t = None
            self.b_out = None

        # --- kernel-side prepared parameters (bf16, pre-padded, done once) ---
        # Fold the softmax scale into the Q columns of the QKV weight so the
        # attention kernel never rescales q (saves 2 casts + 1 mul per head per
        # batch step).
        col_scale = jnp.concatenate(
            [
                jnp.full((inner_dim,), self.scale, jnp.float32),
                jnp.ones((2 * inner_dim,), jnp.float32),
            ]
        )
        self._qkv_lin = PallasLinear(self.w_qkv_t * col_scale[None, :])
        self._out_lin = (
            PallasLinear(self.w_out_t, self.b_out) if self.project_out else None
        )

    def __call__(self, x):
        B, N, dim = x.shape
        H, D = self.heads, self.dim_head
        inner = H * D

        # QKV projection (tiled Pallas matmul, bf16 MXU, f32 accumulation).
        qkv = self._qkv_lin(x.reshape(B * N, dim), out_dtype=jnp.bfloat16)
        qkv = qkv.reshape(B, N, 3 * inner)  # free reshape, no transpose

        # Fused multi-head attention; output already laid out as (B, N, H*D).
        out = pallas_attention(qkv, heads=H, dim_head=D, out_dtype=jnp.bfloat16)

        if self.project_out:
            out = self._out_lin(out.reshape(B * N, inner), out_dtype=x.dtype)
            return out.reshape(B, N, dim)
        return out.astype(x.dtype)


# ----------------------------------------------------------------------------
# Reference (plain JAX, f32) for sanity
# ----------------------------------------------------------------------------
def reference_forward(mod: AttentionPallas, x):
    B, N, dim = x.shape
    H, D = mod.heads, mod.dim_head
    inner = H * D
    qkv = x @ mod.w_qkv_t
    q, k, v = jnp.split(qkv, 3, axis=-1)
    q = q.reshape(B, N, H, D).transpose(0, 2, 1, 3)
    k = k.reshape(B, N, H, D).transpose(0, 2, 1, 3)
    v = v.reshape(B, N, H, D).transpose(0, 2, 1, 3)
    dots = jnp.einsum("bhnd,bhmd->bhnm", q, k) * mod.scale
    attn = jax.nn.softmax(dots, axis=-1)
    out = jnp.einsum("bhnm,bhmd->bhnd", attn, v)
    out = out.transpose(0, 2, 1, 3).reshape(B, N, inner)
    if mod.project_out:
        out = out @ mod.w_out_t + mod.b_out
    return out


if __name__ == "__main__":
    key = jax.random.PRNGKey(0)
    k_param, k_x, k_param2, k_x2 = jax.random.split(key, 4)

    # Config 1 (fallback attention path): small ViT-like shapes.
    B, N, dim = 2, 8, 32
    heads, dim_head = 4, 16
    mod = AttentionPallas(dim, heads=heads, dim_head=dim_head, dropout=0.0, key=k_param)
    x = jax.random.normal(k_x, (B, N, dim), dtype=jnp.float32)
    out = jax.block_until_ready(mod(x))
    ref = reference_forward(mod, x)
    assert out.shape == (B, N, dim)
    assert jnp.allclose(out, ref, atol=2e-2, rtol=2e-2), "mismatch vs reference (cfg1)"

    # Config 2 (lane-aligned grouped attention path, grid=(B, n_groups)).
    B2, N2, dim2 = 2, 8, 64
    heads2, dim_head2 = 4, 64
    mod2 = AttentionPallas(dim2, heads=heads2, dim_head=dim_head2, dropout=0.0, key=k_param2)
    x2 = jax.random.normal(k_x2, (B2, N2, dim2), dtype=jnp.float32)
    out2 = jax.block_until_ready(mod2(x2))
    ref2 = reference_forward(mod2, x2)
    assert out2.shape == (B2, N2, dim2)
    assert jnp.allclose(out2, ref2, atol=2e-2, rtol=2e-2), "mismatch vs reference (cfg2)"

    print("KERNEL_OK")
</pallas_src>

<mosaic_0001>
module attributes {stable_mosaic.version = 11 : i64} {
  func.func @_linear_kernel(%arg0: i32, %arg1: i32, %arg2: i32, %arg3: memref<16x32xbf16, #tpu.memory_space<vmem>>, %arg4: memref<32x192xbf16, #tpu.memory_space<vmem>>, %arg5: memref<16x192xbf16, #tpu.memory_space<vmem>>, %arg6: memref<16x192xf32, #tpu.memory_space<vmem>>) attributes {dimension_semantics = [#tpu.dimension_semantics<parallel>, #tpu.dimension_semantics<parallel>, #tpu.dimension_semantics<arbitrary>], iteration_bounds = array<i64: 1, 1, 1>, scalar_prefetch = 0 : i64, scratch_operands = 1 : i64, tpu.core_type = #tpu.core_type<tc>, window_params = [{transform_indices = @transform_0, window_bounds = array<i64: 16, 32>}, {transform_indices = @transform_1, window_bounds = array<i64: 32, 192>}, {transform_indices = @transform_2, window_bounds = array<i64: 16, 192>}]} {
    %c0_i32 = arith.constant 0 : i32
    %0 = arith.cmpi eq, %arg2, %c0_i32 : i32
    %1 = arith.extui %0 : i1 to i32
    %c0_i32_0 = arith.constant 0 : i32
    %2 = arith.cmpi ne, %1, %c0_i32_0 : i32
    scf.if %2 {
      %cst_10 = arith.constant 0.000000e+00 : f32
      %12 = vector.broadcast %cst_10 : f32 to vector<16x192xf32>
      %c0_11 = arith.constant 0 : index
      %c0_12 = arith.constant 0 : index
      %13 = vector.load %arg6[%c0_11, %c0_12] : memref<16x192xf32, #tpu.memory_space<vmem>>, vector<16x192xf32>
      tpu.vector_store %arg6[%c0_11, %c0_12], %12 {strides = array<i32>} : memref<16x192xf32, #tpu.memory_space<vmem>>, vector<16x192xf32>,
    } else {
    }
    %c0 = arith.constant 0 : index
    %c0_1 = arith.constant 0 : index
    %3 = vector.load %arg6[%c0, %c0_1] : memref<16x192xf32, #tpu.memory_space<vmem>>, vector<16x192xf32>
    %c0_2 = arith.constant 0 : index
    %c0_3 = arith.constant 0 : index
    %4 = vector.load %arg3[%c0_2, %c0_3] : memref<16x32xbf16, #tpu.memory_space<vmem>>, vector<16x32xbf16>
    %c0_4 = arith.constant 0 : index
    %c0_5 = arith.constant 0 : index
    %5 = vector.load %arg4[%c0_4, %c0_5] : memref<32x192xbf16, #tpu.memory_space<vmem>>, vector<32x192xbf16>
    %cst = arith.constant dense<0.000000e+00> : vector<16x192xf32>
    %6 = tpu.matmul %4, %5, %cst {dimension_numbers = #tpu.dot_dimension_numbers<[1], [0], [0], [1], [0, 0, 1, 1], [], []>} : vector<16x32xbf16>, vector<32x192xbf16>, vector<16x192xf32> -> vector<16x192xf32>
    %7 = arith.addf %3, %6 : vector<16x192xf32>
    %c0_6 = arith.constant 0 : index
    %c0_7 = arith.constant 0 : index
    %8 = vector.load %arg6[%c0_6, %c0_7] : memref<16x192xf32, #tpu.memory_space<vmem>>, vector<16x192xf32>
    tpu.vector_store %arg6[%c0_6, %c0_7], %7 {strides = array<i32>} : memref<16x192xf32, #tpu.memory_space<vmem>>, vector<16x192xf32>,
    %c0_i32_8 = arith.constant 0 : i32
    %9 = arith.cmpi eq, %arg2, %c0_i32_8 : i32
    %10 = arith.extui %9 : i1 to i32
    %c0_i32_9 = arith.constant 0 : i32
    %11 = arith.cmpi ne, %10, %c0_i32_9 : i32
    scf.if %11 {
      %c0_10 = arith.constant 0 : index
      %c0_11 = arith.constant 0 : index
      %12 = vector.load %arg6[%c0_10, %c0_11] : memref<16x192xf32, #tpu.memory_space<vmem>>, vector<16x192xf32>
      %13 = arith.truncf %12 : vector<16x192xf32> to vector<16x192xbf16>
      %c0_12 = arith.constant 0 : index
      %c0_13 = arith.constant 0 : index
      %14 = vector.load %arg5[%c0_12, %c0_13] : memref<16x192xbf16, #tpu.memory_space<vmem>>, vector<16x192xbf16>
      tpu.vector_store %arg5[%c0_12, %c0_13], %13 {strides = array<i32>} : memref<16x192xbf16, #tpu.memory_space<vmem>>, vector<16x192xbf16>,
    } else {
    }
    return
  }
  func.func @transform_0(%arg0: i32, %arg1: i32, %arg2: i32) -> (i32, i32) {
    %c0_i32 = arith.constant 0 : i32
    return %arg0, %arg2 : i32, i32
  }
  func.func @transform_1(%arg0: i32, %arg1: i32, %arg2: i32) -> (i32, i32) {
    %c0_i32 = arith.constant 0 : i32
    return %arg2, %arg1 : i32, i32
  }
  func.func @transform_2(%arg0: i32, %arg1: i32, %arg2: i32) -> (i32, i32) {
    %c0_i32 = arith.constant 0 : i32
    return %arg0, %arg1 : i32, i32
  }
}

</mosaic_0001>

<llo_original>
// kernel: tpu_custom_call.1
$region0: #{tpu_custom_call.1}
  #allocation0 [shape = 'u32[]', space=smem, size = 0x4, offset = 0x4, fixed_abs, tag = 'smem constant byte address 0x4 - core index']
  #allocation1 [shape = 'u32[144,128]{1,0:T(1,128)}', space=vmem, size = 0x12000, scoped, tag = 'internal scratch']
  #allocation2 [shape = 'f32[16,192]{1,0:T(8,128)}', space=vmem, size = 0x4000, scoped, tag = 'scratch operand']
  %s0 = inlined_call_operand.hbm [shape: bf16[16,32], index: 0, kind: input, shape index: {}]
  %s1 = inlined_call_operand.hbm [shape: bf16[32,192], index: 1, kind: input, shape index: {}]
  %s2 = inlined_call_operand.hbm [shape: bf16[16,192], index: 2, kind: output, shape index: {}]
  %s3 = sld [smem:[#allocation0]]
  $region34: #{tpu_custom_call.1} parent=0
    _
  %s5 = ssub.s32 1, %s3
  %s6 = scalar_select 0, %s5, %s3
  $region1: #{tpu_custom_call.1} parent=0
    #allocation3 [shape = 'u8[4096]{0}', space=vmem, size = 0x1000, scoped, tag = 'input window, operand 0, single buffered']
    #allocation4 [shape = 's32[1]{0}', space=sflag, size = 0x4, scoped, tag = 'scoped memory for tpu_custom_call.1']
    #allocation5 [shape = 's32[1]{0}', space=sflag, size = 0x4, scoped, tag = 'scoped memory for tpu_custom_call.1']
    #allocation6 [shape = 'u8[16384]{0}', space=vmem, size = 0x4000, scoped, tag = 'input window, operand 1, single buffered']
    #allocation7 [shape = 's32[1]{0}', space=sflag, size = 0x4, scoped, tag = 'scoped memory for tpu_custom_call.1']
    #allocation8 [shape = 'u8[8192]{0}', space=vmem, size = 0x2000, scoped, tag = 'output window, operand 0, single buffered']
    %7 = vsyncpa [#allocation4], 0
    %8 = vsyncpa [#allocation7], 0
    %9 = vsyncpa [#allocation5], 0
    // Predicated region
    $region2: #{tpu_custom_call.1} parent=1 // pred_check
      _
    $region3: #{tpu_custom_call.1} parent=1 // pred_check_branch
      %11 = sbr.rel (0) target = $region5
    $region4: #{tpu_custom_call.1} parent=1 // pred_region
      %s13 = ssub.s32 128, 128
      %14 = vsyncadd [#allocation4], %s13
      %s15 = sshll.u32 [#allocation3], 4
      %s16 = int_to_ptr.vmem [resolvable:$true] %s15
      %21 = dma.hbm_to_vmem [thread:$0]  %s0, 128, %s16, [#allocation4], 64, 64, 4
    $region5: #{tpu_custom_call.1} parent=1 // pred_fallthru
      _
    // Predicated region
    $region6: #{tpu_custom_call.1} parent=1 // pred_check
      _
    $region7: #{tpu_custom_call.1} parent=1 // pred_check_branch
      %23 = sbr.rel (0) target = $region9
    $region8: #{tpu_custom_call.1} parent=1 // pred_region
      %s25 = ssub.s32 512, 512
      %26 = vsyncadd [#allocation7], %s25
      %s27 = sshll.u32 [#allocation6], 4
      %s28 = int_to_ptr.vmem [resolvable:$true] %s27
      %33 = dma.hbm_to_vmem [thread:$0]  %s1, 512, %s28, [#allocation7], 128, 128, 8
    $region9: #{tpu_custom_call.1} parent=1 // pred_fallthru
      _
    // Predicated region
    $region10: #{tpu_custom_call.1} parent=1 // pred_check
      _
    $region11: #{tpu_custom_call.1} parent=1 // pred_check_branch
      %35 = sbr.rel (0) target = $region13
    $region12: #{tpu_custom_call.1} parent=1 // pred_region
      %36 = dma.done [#allocation4], 128
    $region13: #{tpu_custom_call.1} parent=1 // pred_fallthru
      _
    // Predicated region
    $region14: #{tpu_custom_call.1} parent=1 // pred_check
      _
    $region15: #{tpu_custom_call.1} parent=1 // pred_check_branch
      %38 = sbr.rel (0) target = $region17
    $region16: #{tpu_custom_call.1} parent=1 // pred_region
      %39 = dma.done [#allocation7], 512
    $region17: #{tpu_custom_call.1} parent=1 // pred_fallthru
      _
    %p41 = scmp.eq.s32.totalorder 0, 0
    // Predicated region
    $region18: #{tpu_custom_call.1} parent=1 // pred_check
      %p42 = pneg %p41
    $region19: #{tpu_custom_call.1} parent=1 // pred_check_branch
      %44 = sbr.rel (%p42) target = $region21
    $region20: #{tpu_custom_call.1} parent=1 // pred_region
      %45 = vst [vmem:[#allocation2] sm:$0xff] 0.0
      %vm46 = vcmask 523264
      %47 = vst.msk [vmem:[#allocation2 + $0x8] sm:$0xff] %vm46, 0.0
      %48 = vst [vmem:[#allocation2 + $0x10] sm:$0xff] 0.0
      %49 = vst.msk [vmem:[#allocation2 + $0x18] sm:$0xff] %vm46, 0.0
    $region21: #{tpu_custom_call.1} parent=1 // pred_fallthru
      _
    %v50 = vld [vmem:[#allocation2] sm:$0xff]
    %v51 = vld [vmem:[#allocation2 + $0x8] sm:$0xff]
    %v52 = vld [vmem:[#allocation2 + $0x10] sm:$0xff]
    %v53 = vld [vmem:[#allocation2 + $0x18] sm:$0xff]
    %v54 = vld [vmem:[#allocation3] sm:$0xf]
    %v55 = vld [vmem:[#allocation3 + $0x4] sm:$0xf]
    %v56 = vld [vmem:[#allocation6] sm:$0xff]
    %v57 = vld [vmem:[#allocation6 + $0x8] sm:$0xff]
    %v58 = vld [vmem:[#allocation6 + $0x10] sm:$0xff]
    %v59 = vld [vmem:[#allocation6 + $0x18] sm:$0xff]
    %v62 = vunpack.c.l.b16 %v54
    %v63 = vunpack.c.l.b16 %v55
    %v64 = vpack.c.b16 %v63, %v62
    %v69 = vunpack.c.l.b16 %v56
    %v70 = vunpack.c.h.b16 %v56
    %v71 = vunpack.c.l.b16 %v57
    %v72 = vunpack.c.h.b16 %v57
    %v73 = vunpack.c.l.b16 %v58
    %v74 = vunpack.c.h.b16 %v58
    %v75 = vunpack.c.l.b16 %v59
    %v76 = vunpack.c.h.b16 %v59
    %v77 = vpack.c.b16 %v71, %v69
    %v78 = vpack.c.b16 %v72, %v70
    %v79 = vpack.c.b16 %v75, %v73
    %v80 = vpack.c.b16 %v76, %v74
    %vm85 = vcmask 261120
    %v87 = vsel %vm85, %v64, 0
    %89 = vmatprep.subr.bf16.mxu0 %v78
    %90 = vmatpush1.bf16.msra.mxu0 %v77
    %91 = vmatprep.subr.bf16.mxu0 %v80
    %92 = vmatpush1.bf16.msra.mxu0 %v79
    %93 = vmatprep.subr.bf16.mxu0 0
    %94 = vmatpush1.bf16.msra.mxu0 0
    %95 = vmatprep.subr.bf16.mxu0 0
    %96 = vmatpush1.bf16.msra.mxu0 0
    %97 = vmatprep.subr.bf16.mxu0 0
    %98 = vmatpush1.bf16.msra.mxu0 0
    %99 = vmatprep.subr.bf16.mxu0 0
    %100 = vmatpush1.bf16.msra.mxu0 0
    %101 = vmatprep.subr.bf16.mxu0 0
    %102 = vmatpush1.bf16.msra.mxu0 0
    %103 = vmatprep.subr.bf16.mxu0 0
    %104 = vmatpush1.bf16.msra.mxu0 0
    %105 = vmatprep.subr.bf16.mxu0 0
    %106 = vmatpush1.bf16.msra.mxu0 0
    %107 = vmatprep.subr.bf16.mxu0 0
    %108 = vmatpush1.bf16.msra.mxu0 0
    %109 = vmatprep.subr.bf16.mxu0 0
    %110 = vmatpush1.bf16.msra.mxu0 0
    %111 = vmatprep.subr.bf16.mxu0 0
    %112 = vmatpush1.bf16.msra.mxu0 0
    %113 = vmatprep.subr.bf16.mxu0 0
    %114 = vmatpush1.bf16.msra.mxu0 0
    %115 = vmatprep.subr.bf16.mxu0 0
    %116 = vmatpush1.bf16.msra.mxu0 0
    %117 = vmatprep.subr.bf16.mxu0 0
    %118 = vmatpush1.bf16.msra.mxu0 0
    %119 = vmatprep.subr.bf16.mxu0 0
    %120 = vmatpush1.bf16.msra.mxu0 0
    %121 = vmatprep.mubr.bf16.mxu0 0
    %122 = vmatmul.mubr.bf16.gmra.mrb[0].mxu0 %v87
    %v123 = vpop.f32.mrb[0].mxu0
    %v124 = vadd.f32 0.0, %v123
    %v125 = vpop.f32.mrb[0].mxu0
    %v126 = vadd.f32 0.0, %v125
    %v127 = vpop.f32.mrb[0].mxu0
    %v128 = vadd.f32 0.0, %v127
    %v129 = vpop.f32.mrb[0].mxu0
    %v130 = vadd.f32 0.0, %v129
    %131 = vdwg.mxu0
    %v132 = vadd.f32 %v50, %v124
    %v133 = vadd.f32 %v51, %v126
    %v134 = vadd.f32 %v52, %v128
    %v135 = vadd.f32 %v53, %v130
    %136 = vst [vmem:[#allocation2] sm:$0xff] %v132
    %vm137 = vcmask 523264
    %138 = vst.msk [vmem:[#allocation2 + $0x8] sm:$0xff] %vm137, %v133
    %139 = vst [vmem:[#allocation2 + $0x10] sm:$0xff] %v134
    %140 = vst.msk [vmem:[#allocation2 + $0x18] sm:$0xff] %vm137, %v135
    // Predicated region
    $region22: #{tpu_custom_call.1} parent=1 // pred_check
      %p141 = pneg %p41
    $region23: #{tpu_custom_call.1} parent=1 // pred_check_branch
      %143 = sbr.rel (%p141) target = $region25
    $region24: #{tpu_custom_call.1} parent=1 // pred_region
      %v144 = vld [vmem:[#allocation2] sm:$0xff]
      %v145 = vld [vmem:[#allocation2 + $0x8] sm:$0xff]
      %v146 = vld [vmem:[#allocation2 + $0x10] sm:$0xff]
      %v147 = vld [vmem:[#allocation2 + $0x18] sm:$0xff]
      %v148 = vpack.c.bf16 %v146, %v144
      %v149 = vpack.c.bf16 %v147, %v145
      %v152 = vunpack.c.l.b16 %v148
      %v153 = vunpack.c.l.b16 %v149
      %v154 = vunpack.c.h.b16 %v148
      %v155 = vunpack.c.h.b16 %v149
      %v156 = vpack.c.b16 %v153, %v152
      %v157 = vpack.c.b16 %v155, %v154
      %vm160 = vcmask 1043456
      %vm161 = vcmask 523268
      %vm162 = vmor %vm161, %vm160
      %163 = vst.msk [vmem:[#allocation8] sm:$0xff] %vm162, %v156
      %164 = vst.msk [vmem:[#allocation8 + $0x8] sm:$0xff] %vm162, %v157
    $region25: #{tpu_custom_call.1} parent=1 // pred_fallthru
      _
    // Predicated region
    $region26: #{tpu_custom_call.1} parent=1 // pred_check
      _
    $region27: #{tpu_custom_call.1} parent=1 // pred_check_branch
      %166 = sbr.rel (0) target = $region29
    $region28: #{tpu_custom_call.1} parent=1 // pred_region
      %s168 = ssub.s32 256, 256
      %169 = vsyncadd [#allocation5], %s168
      %s170 = sshll.u32 [#allocation8], 4
      %s171 = int_to_ptr.vmem [resolvable:$true] %s170
      %176 = dma.vmem_to_hbm [thread:$0]  %s171, 256, %s2, [#allocation5], 128, 128, 8
    $region29: #{tpu_custom_call.1} parent=1 // pred_fallthru
      _
    // Predicated region
    $region30: #{tpu_custom_call.1} parent=1 // pred_check
      _
    $region31: #{tpu_custom_call.1} parent=1 // pred_check_branch
      %178 = sbr.rel (0) target = $region33
    $region32: #{tpu_custom_call.1} parent=1 // pred_region
      %179 = dma.done [#allocation5], 256
    $region33: #{tpu_custom_call.1} parent=1 // pred_fallthru
      _
    %180 = vsyncpa [#allocation4], 1
    %181 = vsyncpa [#allocation7], 1
    %182 = vsyncpa [#allocation5], 1

</llo_original>
